<compile_context>
chip_gen: v5e
topology: v5e:2x2
jax: 0.10.0
libtpu: 0.0.40
codegen_flags: <defaults>
</compile_context>

<pallas_src>
import functools

import jax
import jax.numpy as jnp
from jax import lax
from jax.experimental import pallas as pl
from jax.experimental.pallas import tpu as pltpu

GROWTH = 32


def _rup(x, m):
    return (x + m - 1) // m * m


# ---------------------------------------------------------------------------
# Fused matmul Pallas kernel:
#   out = epilogue( prologue(A) @ B )
#   prologue = per-K-column affine (+ReLU)  -> BN+ReLU preceding a 1x1 conv
#   epilogue = per-N-column affine (+ReLU)  -> BN+ReLU following a conv
# ---------------------------------------------------------------------------

def _fused_mm_kernel(a_ref, b_ref, isc_ref, ish_ref, osc_ref, osh_ref, o_ref, *,
                     in_affine, in_relu, out_affine, out_relu):
    a = a_ref[...]
    if in_affine:
        af = a.astype(jnp.float32) * isc_ref[...] + ish_ref[...]
        if in_relu:
            af = jnp.maximum(af, 0.0)
        a = af.astype(b_ref.dtype)
    y = jnp.dot(a, b_ref[...], preferred_element_type=jnp.float32)
    if out_affine:
        y = y * osc_ref[...] + osh_ref[...]
    if out_relu:
        y = jnp.maximum(y, 0.0)
    o_ref[...] = y.astype(o_ref.dtype)


def fused_matmul(a, wmat, in_sc=None, in_sh=None, in_relu=False,
                 out_sc=None, out_sh=None, out_relu=False,
                 n_valid=None, out_dtype=jnp.bfloat16):
    """a:(M,K) @ wmat:(K,Np) (bf16, N pre-padded to 128) with fused affine/ReLU."""
    M, K = a.shape
    Kw, Np = wmat.shape
    assert K == Kw, (K, Kw)

    # M tiling: single full block when small; 256-row tiles otherwise (>=2 parallel
    # grid steps so both v7x TensorCores get work on larger inputs).
    if M <= 256:
        tm = _rup(M, 8)
        Mp = tm
    else:
        tm = 256
        Mp = _rup(M, tm)
    # N tiling: full block up to 512 lanes (lane-dense stores), else 256-wide tiles.
    tn = Np if Np <= 512 else (256 if Np % 256 == 0 else 128)

    a_p = a.astype(jnp.bfloat16)
    if Mp != M:
        a_p = jnp.pad(a_p, ((0, Mp - M), (0, 0)))

    in_affine = in_sc is not None
    out_affine = out_sc is not None
    if in_affine:
        isc = jnp.asarray(in_sc, jnp.float32).reshape(1, K)
        ish = jnp.asarray(in_sh, jnp.float32).reshape(1, K)
    else:
        isc = jnp.ones((1, K), jnp.float32)
        ish = jnp.zeros((1, K), jnp.float32)
    if out_affine:
        osc = jnp.asarray(out_sc, jnp.float32).reshape(1, Np)
        osh = jnp.asarray(out_sh, jnp.float32).reshape(1, Np)
    else:
        osc = jnp.ones((1, Np), jnp.float32)
        osh = jnp.zeros((1, Np), jnp.float32)

    kern = functools.partial(_fused_mm_kernel, in_affine=in_affine, in_relu=in_relu,
                             out_affine=out_affine, out_relu=out_relu)
    out = pl.pallas_call(
        kern,
        out_shape=jax.ShapeDtypeStruct((Mp, Np), out_dtype),
        grid=(Mp // tm, Np // tn),
        in_specs=[pl.BlockSpec((tm, K), lambda i, j: (i, 0)),
                  pl.BlockSpec((K, tn), lambda i, j: (0, j)),
                  pl.BlockSpec((1, K), lambda i, j: (0, 0)),
                  pl.BlockSpec((1, K), lambda i, j: (0, 0)),
                  pl.BlockSpec((1, tn), lambda i, j: (0, j)),
                  pl.BlockSpec((1, tn), lambda i, j: (0, j))],
        out_specs=pl.BlockSpec((tm, tn), lambda i, j: (i, j)),
        compiler_params=pltpu.CompilerParams(
            dimension_semantics=("parallel", "parallel")),
    )(a_p, wmat, isc, ish, osc, osh)

    out = out[:M]
    if n_valid is not None and n_valid != Np:
        out = out[:, :n_valid]
    return out


# ---------------------------------------------------------------------------
# Conv / pooling helpers (conv matmuls run through the Pallas kernel)
# ---------------------------------------------------------------------------

def conv2d_fused(x, wp, stride=1, padding=0, in_sc=None, in_sh=None, in_relu=False,
                 out_sc=None, out_sh=None, out_relu=False, out_dtype=jnp.bfloat16):
    """x: (N,H,W,Cin) NHWC bf16 ; wp: prepared weight dict ; no bias (DenseNet convs)."""
    N, H, W, Cin = x.shape
    kh, kw, cin, cout = wp['kh'], wp['kw'], wp['cin'], wp['cout']
    assert Cin == cin
    if kh == 1 and kw == 1 and stride == 1 and padding == 0:
        a = x.reshape(N * H * W, Cin)                     # no im2col for 1x1
        Ho, Wo = H, W
    else:
        assert in_sc is None   # prologue fusion is only used for 1x1 convs here
        xp = jnp.pad(x, ((0, 0), (padding, padding), (padding, padding), (0, 0)))
        Hp, Wp = xp.shape[1], xp.shape[2]
        Ho = (Hp - kh) // stride + 1
        Wo = (Wp - kw) // stride + 1
        cols = []
        for i in range(kh):
            for j in range(kw):
                cols.append(xp[:, i:i + (Ho - 1) * stride + 1:stride,
                                j:j + (Wo - 1) * stride + 1:stride, :])
        a = jnp.concatenate(cols, axis=-1).reshape(N * Ho * Wo, kh * kw * Cin)  # bf16
    Kp = wp['w'].shape[0]
    if a.shape[1] != Kp:                                  # only the 7x7 stem (147 -> 152)
        a = jnp.pad(a, ((0, 0), (0, Kp - a.shape[1])))
    out = fused_matmul(a, wp['w'], in_sc, in_sh, in_relu,
                       out_sc, out_sh, out_relu, n_valid=cout, out_dtype=out_dtype)
    return out.reshape(N, Ho, Wo, cout)


def maxpool_3x3_s2_p1(x):
    return lax.reduce_window(x, jnp.asarray(-jnp.inf, x.dtype), lax.max,
                             window_dimensions=(1, 3, 3, 1),
                             window_strides=(1, 2, 2, 1),
                             padding=((0, 0), (1, 1), (1, 1), (0, 0)))


def avgpool_2x2(x):
    # assumes even H/W (true for DenseNet-121 on 32x32 input)
    N, H, W, C = x.shape
    y = x.astype(jnp.float32).reshape(N, H // 2, 2, W // 2, 2, C).mean(axis=(2, 4))
    return y.astype(x.dtype)


def layer_norm(x, g, b, eps=1e-5):
    mu = x.mean(-1, keepdims=True)
    var = ((x - mu) ** 2).mean(-1, keepdims=True)
    return (x - mu) / jnp.sqrt(var + eps) * g + b


# ---------------------------------------------------------------------------
# Parameter construction (deterministic, mirrors DenseNet-121 + heads __init__)
# ---------------------------------------------------------------------------

class KeyGen:
    def __init__(self, key):
        self.key = key

    def __call__(self):
        self.key, k = jax.random.split(self.key)
        return k


def conv_w(kg, cout, cin, kh, kw):
    fan_in = cin * kh * kw
    return (jax.random.normal(kg(), (cout, cin, kh, kw), jnp.float32)
            / jnp.sqrt(jnp.float32(fan_in)))


def linear_p(kg, fin, fout):
    w = jax.random.normal(kg(), (fin, fout), jnp.float32) / jnp.sqrt(jnp.float32(fin))
    b = jax.random.normal(kg(), (fout,), jnp.float32) * 0.01
    return w, b


def bn_p(c):
    # (gamma, beta, running_mean, running_var) - PyTorch default init
    return (jnp.ones((c,), jnp.float32), jnp.zeros((c,), jnp.float32),
            jnp.zeros((c,), jnp.float32), jnp.ones((c,), jnp.float32))


def build_params(seed=0, num_tasks=4):
    kg = KeyGen(jax.random.PRNGKey(seed))
    growth, bn_size = GROWTH, 4
    block_cfg = (6, 12, 24, 16)

    p = {}
    p['conv0'] = conv_w(kg, 64, 3, 7, 7)
    p['norm0'] = bn_p(64)

    num_features = 64
    blocks = []
    for bi, nl in enumerate(block_cfg):
        layers = []
        c = num_features
        for _ in range(nl):
            layers.append({
                'norm1': bn_p(c),
                'conv1': conv_w(kg, bn_size * growth, c, 1, 1),
                'norm2': bn_p(bn_size * growth),
                'conv2': conv_w(kg, growth, bn_size * growth, 3, 3),
            })
            c += growth
        num_features = c
        ratio = 16 * (bi + 2) // 2          # 16, 24, 32, 40
        hidden = num_features // ratio
        att = {
            'ca_w1': conv_w(kg, hidden, num_features, 1, 1),
            'ca_w2': conv_w(kg, num_features, hidden, 1, 1),
            'sa_w': conv_w(kg, 1, 2, 7, 7),
        }
        block = {'layers': layers, 'att': att}
        if bi != len(block_cfg) - 1:
            block['trans'] = {'norm': bn_p(num_features),
                              'conv': conv_w(kg, num_features // 2, num_features, 1, 1)}
            num_features //= 2
        blocks.append(block)
    p['blocks'] = blocks
    p['norm5'] = bn_p(num_features)            # 1024

    nf = num_features                           # 1024
    p['ln'] = (jnp.ones((nf,), jnp.float32), jnp.zeros((nf,), jnp.float32))
    p['fc1'] = linear_p(kg, nf, nf // 2)        # 1024 -> 512
    p['fc2'] = linear_p(kg, nf // 2, nf // 4)   # 512  -> 256
    shared_dim = int((nf // 4) * 0.5)           # 128
    task_dim = 512
    p['shared_proj'] = linear_p(kg, nf // 4, shared_dim)
    p['task_proj'] = [linear_p(kg, nf // 4, task_dim - shared_dim)
                      for _ in range(num_tasks)]
    p['task_cls'] = [(linear_p(kg, nf // 2, nf // 8), linear_p(kg, nf // 8, 2))
                     for _ in range(num_tasks)]
    return p


# ---------------------------------------------------------------------------
# One-time weight preparation: transpose / pad / cast to the compute layout
# ---------------------------------------------------------------------------

def _bn_fold(bn, eps=1e-5):
    gamma, beta, mean, var = bn
    scale = gamma / jnp.sqrt(var + eps)
    shift = beta - mean * scale
    return scale, shift


def _prep_conv(w):
    cout, cin, kh, kw = w.shape
    k = kh * kw * cin
    kp = _rup(k, 8)
    npad = _rup(cout, 128)
    wmat = jnp.transpose(w, (2, 3, 1, 0)).reshape(k, cout)
    wmat = jnp.pad(wmat, ((0, kp - k), (0, npad - cout))).astype(jnp.bfloat16)
    return {'w': wmat, 'kh': kh, 'kw': kw, 'cin': cin, 'cout': cout}


def _pad_affine(scale, shift, npad):
    c = scale.shape[0]
    sc = jnp.pad(scale, (0, npad - c), constant_values=1.0).reshape(1, npad)
    sh = jnp.pad(shift, (0, npad - c)).reshape(1, npad)
    return sc.astype(jnp.float32), sh.astype(jnp.float32)


def prepare_params(p):
    prep = {}
    c0 = _prep_conv(p['conv0'])
    s0, h0 = _bn_fold(p['norm0'])
    prep['conv0'] = c0
    prep['osc0'], prep['osh0'] = _pad_affine(s0, h0, c0['w'].shape[1])

    blocks = []
    for b in p['blocks']:
        layers = []
        for lp in b['layers']:
            c1 = _prep_conv(lp['conv1'])
            c2 = _prep_conv(lp['conv2'])
            is1, ih1 = _bn_fold(lp['norm1'])            # prologue for conv1
            os2, oh2 = _bn_fold(lp['norm2'])            # epilogue for conv1
            osc, osh = _pad_affine(os2, oh2, c1['w'].shape[1])
            layers.append({'conv1': c1, 'conv2': c2,
                           'isc': is1.reshape(1, -1).astype(jnp.float32),
                           'ish': ih1.reshape(1, -1).astype(jnp.float32),
                           'osc': osc, 'osh': osh})
        att_p = b['att']
        hid, C = att_p['ca_w1'].shape[0], att_p['ca_w1'].shape[1]
        att = {'ca_w1': att_p['ca_w1'].reshape(hid, C).T,                      # (C, hid)
               'ca_w2': att_p['ca_w2'].reshape(C, hid).T,                      # (hid, C)
               'sa_w': jnp.transpose(att_p['sa_w'], (2, 3, 1, 0)).reshape(98, 1)}
        nb = {'layers': layers, 'att': att}
        if 'trans' in b:
            ct = _prep_conv(b['trans']['conv'])
            ts, th = _bn_fold(b['trans']['norm'])       # prologue for transition conv
            nb['trans'] = {'conv': ct,
                           'isc': ts.reshape(1, -1).astype(jnp.float32),
                           'ish': th.reshape(1, -1).astype(jnp.float32)}
        blocks.append(nb)
    prep['blocks'] = blocks

    s5, h5 = _bn_fold(p['norm5'])
    prep['n5_scale'], prep['n5_shift'] = s5, h5          # applied post-GAP (commutes)

    prep['ln'] = p['ln']
    prep['fc1'] = p['fc1']
    prep['fc2'] = p['fc2']
    prep['shared_proj'] = p['shared_proj']
    prep['task_proj_w'] = jnp.stack([w for w, _ in p['task_proj']])     # (T,256,384)
    prep['task_proj_b'] = jnp.stack([bb for _, bb in p['task_proj']])   # (T,384)
    prep['task_cls_w1'] = jnp.stack([c[0][0] for c in p['task_cls']])   # (T,512,128)
    prep['task_cls_b1'] = jnp.stack([c[0][1] for c in p['task_cls']])
    prep['task_cls_w2'] = jnp.stack([c[1][0] for c in p['task_cls']])   # (T,128,2)
    prep['task_cls_b2'] = jnp.stack([c[1][1] for c in p['task_cls']])
    return prep


# ---------------------------------------------------------------------------
# Forward pass
# ---------------------------------------------------------------------------

def dense_block(x, layers):
    N, H, W, C0 = x.shape
    Cf = C0 + GROWTH * len(layers)
    buf = jnp.zeros((N, H, W, Cf), jnp.bfloat16)        # preallocated full-width buffer
    buf = lax.dynamic_update_slice(buf, x, (0, 0, 0, 0))
    C = C0
    for lp in layers:
        feats = buf[:, :, :, :C].reshape(N * H * W, C)
        # 1x1 conv1 with fused norm1+ReLU prologue and norm2+ReLU epilogue
        y1 = fused_matmul(feats, lp['conv1']['w'],
                          in_sc=lp['isc'], in_sh=lp['ish'], in_relu=True,
                          out_sc=lp['osc'], out_sh=lp['osh'], out_relu=True,
                          n_valid=lp['conv1']['cout'])
        y1 = y1.reshape(N, H, W, lp['conv1']['cout'])
        # 3x3 conv2 (bf16 im2col; no affine — next layer's norm1 is its conv1 prologue)
        y2 = conv2d_fused(y1, lp['conv2'], stride=1, padding=1)
        # eval-mode Dropout(p=dp2) on the new features is identity
        buf = lax.dynamic_update_slice(buf, y2, (0, 0, 0, C))
        C += GROWTH
    return buf


def block_attention(x, att):
    # tiny matmuls / 7x7 conv -> plain XLA (padding them to MXU tiles is slower)
    N, H, W, C = x.shape
    xf = x.astype(jnp.float32)
    avg = xf.mean(axis=(1, 2))                           # (N, C)
    mx = xf.max(axis=(1, 2))                             # (N, C)

    def mlp(v):
        return jnp.maximum(v @ att['ca_w1'], 0.0) @ att['ca_w2']

    ca = jax.nn.sigmoid(mlp(avg) + mlp(mx))              # (N, C)
    xf = xf * ca[:, None, None, :]

    a = xf.mean(axis=-1, keepdims=True)
    m = xf.max(axis=-1, keepdims=True)
    s = jnp.concatenate([a, m], axis=-1)                 # (N,H,W,2), order [avg, max]
    sp = jnp.pad(s, ((0, 0), (3, 3), (3, 3), (0, 0)))
    cols = [sp[:, i:i + H, j:j + W, :] for i in range(7) for j in range(7)]
    patches = jnp.concatenate(cols, axis=-1).reshape(N * H * W, 98)
    sa = (patches @ att['sa_w']).reshape(N, H, W, 1)     # 7x7 conv, 2 -> 1 channel
    return (xf * jax.nn.sigmoid(sa)).astype(jnp.bfloat16)


def transition(x, tp):
    N, H, W, C = x.shape
    cout = tp['conv']['cout']
    # BN+ReLU fused as prologue of the 1x1 transition conv
    y = fused_matmul(x.reshape(N * H * W, C), tp['conv']['w'],
                     in_sc=tp['isc'], in_sh=tp['ish'], in_relu=True,
                     n_valid=cout)
    return avgpool_2x2(y.reshape(N, H, W, cout))


def forward(prep, x_nchw):
    x = jnp.transpose(x_nchw, (0, 2, 3, 1)).astype(jnp.bfloat16)   # NCHW -> NHWC bf16

    # stem: 7x7/2 conv with fused norm0+ReLU epilogue, then 3x3/2 maxpool
    x = conv2d_fused(x, prep['conv0'], stride=2, padding=3,
                     out_sc=prep['osc0'], out_sh=prep['osh0'], out_relu=True)
    x = maxpool_3x3_s2_p1(x)

    for block in prep['blocks']:
        x = dense_block(x, block['layers'])
        x = block_attention(x, block['att'])
        if 'trans' in block:
            x = transition(x, block['trans'])

    # norm5 has no ReLU in .features and commutes with the spatial mean -> post-GAP affine
    feat = x.astype(jnp.float32).mean(axis=(1, 2))                 # (N, 1024)
    feat = feat * prep['n5_scale'] + prep['n5_shift']

    # classifier head (Dropout(p=dp1) identity in eval) — tiny, plain XLA
    g, b = prep['ln']
    h = layer_norm(feat, g, b)
    h = jnp.maximum(h @ prep['fc1'][0] + prep['fc1'][1], 0.0)
    h = jax.nn.gelu(h @ prep['fc2'][0] + prep['fc2'][1], approximate=False)

    # task-specific decoupling + batched task classifiers
    shared = h @ prep['shared_proj'][0] + prep['shared_proj'][1]   # (N, 128)
    tproj = (jnp.einsum('nd,tdh->tnh', h, prep['task_proj_w'])
             + prep['task_proj_b'][:, None, :])                    # (T, N, 384)
    T = tproj.shape[0]
    tf = jnp.concatenate(
        [jnp.broadcast_to(shared[None], (T,) + shared.shape), tproj], axis=-1)  # (T,N,512)
    z = jnp.maximum(jnp.einsum('tnd,tdh->tnh', tf, prep['task_cls_w1'])
                    + prep['task_cls_b1'][:, None, :], 0.0)
    z = (jnp.einsum('tnd,tdh->tnh', z, prep['task_cls_w2'])
         + prep['task_cls_b2'][:, None, :])                        # (T, N, 2)
    return jnp.transpose(z, (1, 0, 2))                             # (N, T, 2)


# ---------------------------------------------------------------------------

if __name__ == "__main__":
    num_tasks = 4
    params = build_params(seed=0, num_tasks=num_tasks)
    prep = prepare_params(params)          # one-time weight layout prep (bf16, padded)

    key = jax.random.PRNGKey(0)
    x = jax.random.normal(key, (2, 3, 32, 32), jnp.float32)        # NCHW like PyTorch

    out = forward(prep, x)
    out = jax.block_until_ready(out)

    assert out.shape == (2, num_tasks, 2), out.shape
    assert out.dtype == jnp.float32
    assert bool(jnp.all(jnp.isfinite(out)))
    print("KERNEL_OK")
</pallas_src>

<mosaic_0001>
module attributes {stable_mosaic.version = 11 : i64} {
  func.func @_fused_mm_kernel(%arg0: i32, %arg1: i32, %arg2: memref<256x152xbf16, #tpu.memory_space<vmem>>, %arg3: memref<152x128xbf16, #tpu.memory_space<vmem>>, %arg4: memref<1x152xf32, #tpu.memory_space<vmem>>, %arg5: memref<1x152xf32, #tpu.memory_space<vmem>>, %arg6: memref<1x128xf32, #tpu.memory_space<vmem>>, %arg7: memref<1x128xf32, #tpu.memory_space<vmem>>, %arg8: memref<256x128xbf16, #tpu.memory_space<vmem>>) attributes {dimension_semantics = [#tpu.dimension_semantics<parallel>, #tpu.dimension_semantics<parallel>], iteration_bounds = array<i64: 2, 1>, scalar_prefetch = 0 : i64, scratch_operands = 0 : i64, tpu.core_type = #tpu.core_type<tc>, window_params = [{transform_indices = @transform_0, window_bounds = array<i64: 256, 152>}, {transform_indices = @transform_1, window_bounds = array<i64: 152, 128>}, {pipeline_mode = #tpu.pipeline_mode<synchronous>, transform_indices = @transform_2, window_bounds = array<i64: 1, 152>}, {pipeline_mode = #tpu.pipeline_mode<synchronous>, transform_indices = @transform_3, window_bounds = array<i64: 1, 152>}, {transform_indices = @transform_4, window_bounds = array<i64: 1, 128>}, {transform_indices = @transform_5, window_bounds = array<i64: 1, 128>}, {transform_indices = @transform_6, window_bounds = array<i64: 256, 128>}]} {
    %c0 = arith.constant 0 : index
    %c0_0 = arith.constant 0 : index
    %0 = vector.load %arg2[%c0, %c0_0] : memref<256x152xbf16, #tpu.memory_space<vmem>>, vector<256x152xbf16>
    %c0_1 = arith.constant 0 : index
    %c0_2 = arith.constant 0 : index
    %1 = vector.load %arg3[%c0_1, %c0_2] : memref<152x128xbf16, #tpu.memory_space<vmem>>, vector<152x128xbf16>
    %cst = arith.constant dense<0.000000e+00> : vector<256x128xf32>
    %2 = tpu.matmul %0, %1, %cst {dimension_numbers = #tpu.dot_dimension_numbers<[1], [0], [0], [1], [0, 0, 1, 1], [], []>} : vector<256x152xbf16>, vector<152x128xbf16>, vector<256x128xf32> -> vector<256x128xf32>
    %c0_3 = arith.constant 0 : index
    %c0_4 = arith.constant 0 : index
    %3 = vector.load %arg6[%c0_3, %c0_4] : memref<1x128xf32, #tpu.memory_space<vmem>>, vector<1x128xf32>
    %4 = vector.broadcast %3 : vector<1x128xf32> to vector<256x128xf32>
    %5 = arith.mulf %2, %4 : vector<256x128xf32>
    %c0_5 = arith.constant 0 : index
    %c0_6 = arith.constant 0 : index
    %6 = vector.load %arg7[%c0_5, %c0_6] : memref<1x128xf32, #tpu.memory_space<vmem>>, vector<1x128xf32>
    %7 = vector.broadcast %6 : vector<1x128xf32> to vector<256x128xf32>
    %8 = arith.addf %5, %7 : vector<256x128xf32>
    %cst_7 = arith.constant 0.000000e+00 : f32
    %9 = vector.broadcast %cst_7 : f32 to vector<256x128xf32>
    %10 = arith.maximumf %8, %9 : vector<256x128xf32>
    %11 = arith.truncf %10 : vector<256x128xf32> to vector<256x128xbf16>
    %c0_8 = arith.constant 0 : index
    %c0_9 = arith.constant 0 : index
    %12 = vector.load %arg8[%c0_8, %c0_9] : memref<256x128xbf16, #tpu.memory_space<vmem>>, vector<256x128xbf16>
    tpu.vector_store %arg8[%c0_8, %c0_9], %11 {strides = array<i32>} : memref<256x128xbf16, #tpu.memory_space<vmem>>, vector<256x128xbf16>,
    return
  }
  func.func @transform_0(%arg0: i32, %arg1: i32) -> (i32, i32) {
    %c0_i32 = arith.constant 0 : i32
    %c0_i32_0 = arith.constant 0 : i32
    return %arg0, %c0_i32 : i32, i32
  }
  func.func @transform_1(%arg0: i32, %arg1: i32) -> (i32, i32) {
    %c0_i32 = arith.constant 0 : i32
    %c0_i32_0 = arith.constant 0 : i32
    return %c0_i32, %arg1 : i32, i32
  }
  func.func @transform_2(%arg0: i32, %arg1: i32) -> (i32, i32) {
    %c0_i32 = arith.constant 0 : i32
    %c0_i32_0 = arith.constant 0 : i32
    %c0_i32_1 = arith.constant 0 : i32
    return %c0_i32, %c0_i32_0 : i32, i32
  }
  func.func @transform_3(%arg0: i32, %arg1: i32) -> (i32, i32) {
    %c0_i32 = arith.constant 0 : i32
    %c0_i32_0 = arith.constant 0 : i32
    %c0_i32_1 = arith.constant 0 : i32
    return %c0_i32, %c0_i32_0 : i32, i32
  }
  func.func @transform_4(%arg0: i32, %arg1: i32) -> (i32, i32) {
    %c0_i32 = arith.constant 0 : i32
    %c0_i32_0 = arith.constant 0 : i32
    return %c0_i32, %arg1 : i32, i32
  }
  func.func @transform_5(%arg0: i32, %arg1: i32) -> (i32, i32) {
    %c0_i32 = arith.constant 0 : i32
    %c0_i32_0 = arith.constant 0 : i32
    return %c0_i32, %arg1 : i32, i32
  }
  func.func @transform_6(%arg0: i32, %arg1: i32) -> (i32, i32) {
    %c0_i32 = arith.constant 0 : i32
    return %arg0, %arg1 : i32, i32
  }
}

</mosaic_0001>

<llo_original>
// kernel: tpu_custom_call.1
$region0: #{tpu_custom_call.1}
  #allocation0 [shape = 'u32[]', space=smem, size = 0x4, offset = 0x4, fixed_abs, tag = 'smem constant byte address 0x4 - core index']
  #allocation1 [shape = 'u32[72,128]{1,0:T(1,128)}', space=vmem, size = 0x9000, scoped, tag = 'internal scratch']
  %s0 = inlined_call_operand.vmem [shape: bf16[512,152], index: 0, kind: input, shape index: {}]
  %s1 = inlined_call_operand.vmem [shape: bf16[152,128], index: 1, kind: input, shape index: {}]
  %s2 = inlined_call_operand.vmem [shape: f32[1,152], index: 2, kind: input, shape index: {}]
  %s3 = inlined_call_operand.vmem [shape: f32[1,152], index: 3, kind: input, shape index: {}]
  %s4 = inlined_call_operand.vmem [shape: f32[1,128], index: 4, kind: input, shape index: {}]
  %s5 = inlined_call_operand.vmem [shape: f32[1,128], index: 5, kind: input, shape index: {}]
  %s6 = inlined_call_operand.hbm [shape: bf16[512,128], index: 6, kind: output, shape index: {}]
  %s7 = sld [smem:[#allocation0]]
  $region57: #{tpu_custom_call.1} parent=0
    _
  %s9 = ssub.s32 1, %s7
  %s10 = scalar_select 0, %s9, %s7
  $region1: #{tpu_custom_call.1} parent=0
    #allocation2 [shape = 'u8[131072]{0}', space=vmem, size = 0x20000, scoped, tag = 'output window, operand 0']
    #allocation3 [shape = 's32[2]{0}', space=sflag, size = 0x8, scoped, tag = 'scoped memory for tpu_custom_call.1']
    %11 = vsyncpa [#allocation3], 0
    %s12 = scalar_lea.sflag [#allocation3], 1
    %13 = vsyncpa %s12, 0
    loop: start=0, step=1, limit=4
    $region2: #{tpu_custom_call.1} parent=1 // loop_pre_header
      _
    $region3: #{tpu_custom_call.1} parent=1 // loop_header
      %s15 = sphi 0, %s19
      %p16 = scmp.ge.s32.totalorder %s15, 4
      %s22 = sphi 0, %s34
      %s23 = sphi 0, %s30
      %s24 = sphi 0, %s22
      %s25 = sphi 0, %s23
      %s26 = sphi 0, %s24
      %s27 = sphi 0, %s25
      %s37 = sphi 0, %s39
      %s40 = sphi 0, %s37
      %s41 = sphi 0, %s40
      %s57 = sphi 0, %s41
      %s63 = sphi 0, %s65
      %s66 = sphi 0, %s63
      %s67 = sphi 0, %s66
      %s83 = sphi 0, %s67
      %s87 = sphi 0, %s87
      %s89 = sphi 0, %s87
      %s90 = sphi 0, %s89
      %s104 = sphi 0, %s90
      %s108 = sphi 0, %s108
      %s110 = sphi 0, %s108
      %s111 = sphi 0, %s110
      %s125 = sphi 0, %s111
      %s131 = sphi 0, %s133
      %s134 = sphi 0, %s131
      %s135 = sphi 0, %s134
      %s151 = sphi 0, %s135
      %s157 = sphi 0, %s159
      %s160 = sphi 0, %s157
      %s161 = sphi 0, %s160
      %s177 = sphi 0, %s161
      %s185 = sphi 0, %s187
      %s188 = sphi 0, %s185
      %s189 = sphi 0, %s188
      %s205 = sphi 0, %s189
    $region4: #{tpu_custom_call.1} parent=1 // loop_header_branch
      %18 = sbr.rel (%p16) target = $region8
    $region5: #{tpu_custom_call.1} parent=1 // loop_body
      %s20 = ssub.s32 %s15, 1
      %s21 = ssub.s32 %s15, 2
      %s28 = sadd.s32 1, %s23
      %p29 = scmp.ge.s32.totalorder %s28, 1
      %s30 = scalar_select %p29, 0, %s28
      %s31 = sadd.s32 1, %s22
      %s32 = scalar_select %p29, %s31, %s22
      %p33 = scmp.ge.s32.totalorder %s32, 2
      %s34 = scalar_select %p33, 0, %s32
      %s35 = ssub.s32 %s22, %s34
      %p36 = scmp.eq.s32.totalorder %s35, 0
      %s38 = sadd.s32 %s37, 1
      %s39 = scalar_select %p36, %s37, %s38
      %p42 = pneg %p36
      %p43 = scmp.eq.s32.totalorder %s15, 1
      %p44 = por %p42, %p43
      %p45 = scmp.ne.s32.totalorder %s37, %s40
      %p46 = scmp.eq.s32.totalorder %s15, 0
      %p47 = por %p45, %p46
      %p48 = scmp.ne.s32.totalorder %s37, %s40
      %p49 = scmp.eq.s32.totalorder %s20, 1
      %p50 = por %p48, %p49
      %p51 = scmp.ne.s32.totalorder %s40, %s41
      %p52 = scmp.eq.s32.totalorder %s20, 0
      %p53 = por %p51, %p52
      %p54 = scmp.ne.s32.totalorder %s40, %s41
      %p55 = scmp.eq.s32.totalorder %s21, 1
      %p56 = por %p54, %p55
      %p58 = scmp.ne.s32.totalorder %s41, %s57
      %p59 = scmp.eq.s32.totalorder %s21, 0
      %p60 = por %p58, %p59
      %s61 = ssub.s32 %s23, %s30
      %p62 = scmp.eq.s32.totalorder %s61, 0
      %s64 = sadd.s32 %s63, 1
      %s65 = scalar_select %p62, %s63, %s64
      %p68 = pneg %p62
      %p69 = scmp.eq.s32.totalorder %s15, 1
      %p70 = por %p68, %p69
      %p71 = scmp.ne.s32.totalorder %s63, %s66
      %p72 = scmp.eq.s32.totalorder %s15, 0
      %p73 = por %p71, %p72
      %p74 = scmp.ne.s32.totalorder %s63, %s66
      %p75 = scmp.eq.s32.totalorder %s20, 1
      %p76 = por %p74, %p75
      %p77 = scmp.ne.s32.totalorder %s66, %s67
      %p78 = scmp.eq.s32.totalorder %s20, 0
      %p79 = por %p77, %p78
      %p80 = scmp.ne.s32.totalorder %s66, %s67
      %p81 = scmp.eq.s32.totalorder %s21, 1
      %p82 = por %p80, %p81
      %p84 = scmp.ne.s32.totalorder %s67, %s83
      %p85 = scmp.eq.s32.totalorder %s21, 0
      %p86 = por %p84, %p85
      %s88 = sadd.s32 %s87, 1
      %p91 = scmp.eq.s32.totalorder %s15, 1
      %p92 = scmp.ne.s32.totalorder %s87, %s89
      %p93 = scmp.eq.s32.totalorder %s15, 0
      %p94 = por %p92, %p93
      %p95 = scmp.ne.s32.totalorder %s87, %s89
      %p96 = scmp.eq.s32.totalorder %s20, 1
      %p97 = por %p95, %p96
      %p98 = scmp.ne.s32.totalorder %s89, %s90
      %p99 = scmp.eq.s32.totalorder %s20, 0
      %p100 = por %p98, %p99
      %p101 = scmp.ne.s32.totalorder %s89, %s90
      %p102 = scmp.eq.s32.totalorder %s21, 1
      %p103 = por %p101, %p102
      %p105 = scmp.ne.s32.totalorder %s90, %s104
      %p106 = scmp.eq.s32.totalorder %s21, 0
      %p107 = por %p105, %p106
      %s109 = sadd.s32 %s108, 1
      %p112 = scmp.eq.s32.totalorder %s15, 1
      %p113 = scmp.ne.s32.totalorder %s108, %s110
      %p114 = scmp.eq.s32.totalorder %s15, 0
      %p115 = por %p113, %p114
      %p116 = scmp.ne.s32.totalorder %s108, %s110
      %p117 = scmp.eq.s32.totalorder %s20, 1
      %p118 = por %p116, %p117
      %p119 = scmp.ne.s32.totalorder %s110, %s111
      %p120 = scmp.eq.s32.totalorder %s20, 0
      %p121 = por %p119, %p120
      %p122 = scmp.ne.s32.totalorder %s110, %s111
      %p123 = scmp.eq.s32.totalorder %s21, 1
      %p124 = por %p122, %p123
      %p126 = scmp.ne.s32.totalorder %s111, %s125
      %p127 = scmp.eq.s32.totalorder %s21, 0
      %p128 = por %p126, %p127
      %s129 = ssub.s32 %s23, %s30
      %p130 = scmp.eq.s32.totalorder %s129, 0
      %s132 = sadd.s32 %s131, 1
      %s133 = scalar_select %p130, %s131, %s132
      %p136 = pneg %p130
      %p137 = scmp.eq.s32.totalorder %s15, 1
      %p138 = por %p136, %p137
      %p139 = scmp.ne.s32.totalorder %s131, %s134
      %p140 = scmp.eq.s32.totalorder %s15, 0
      %p141 = por %p139, %p140
      %p142 = scmp.ne.s32.totalorder %s131, %s134
      %p143 = scmp.eq.s32.totalorder %s20, 1
      %p144 = por %p142, %p143
      %p145 = scmp.ne.s32.totalorder %s134, %s135
      %p146 = scmp.eq.s32.totalorder %s20, 0
      %p147 = por %p145, %p146
      %p148 = scmp.ne.s32.totalorder %s134, %s135
      %p149 = scmp.eq.s32.totalorder %s21, 1
      %p150 = por %p148, %p149
      %p152 = scmp.ne.s32.totalorder %s135, %s151
      %p153 = scmp.eq.s32.totalorder %s21, 0
      %p154 = por %p152, %p153
      %s155 = ssub.s32 %s23, %s30
      %p156 = scmp.eq.s32.totalorder %s155, 0
      %s158 = sadd.s32 %s157, 1
      %s159 = scalar_select %p156, %s157, %s158
      %p162 = pneg %p156
      %p163 = scmp.eq.s32.totalorder %s15, 1
      %p164 = por %p162, %p163
      %p165 = scmp.ne.s32.totalorder %s157, %s160
      %p166 = scmp.eq.s32.totalorder %s15, 0
      %p167 = por %p165, %p166
      %p168 = scmp.ne.s32.totalorder %s157, %s160
      %p169 = scmp.eq.s32.totalorder %s20, 1
      %p170 = por %p168, %p169
      %p171 = scmp.ne.s32.totalorder %s160, %s161
      %p172 = scmp.eq.s32.totalorder %s20, 0
      %p173 = por %p171, %p172
      %p174 = scmp.ne.s32.totalorder %s160, %s161
      %p175 = scmp.eq.s32.totalorder %s21, 1
      %p176 = por %p174, %p175
      %p178 = scmp.ne.s32.totalorder %s161, %s177
      %p179 = scmp.eq.s32.totalorder %s21, 0
      %p180 = por %p178, %p179
      %s181 = ssub.s32 %s22, %s34
      %s182 = ssub.s32 %s23, %s30
      %s183 = sor.u32 %s181, %s182
      %p184 = scmp.eq.s32.totalorder %s183, 0
      %s186 = sadd.s32 %s185, 1
      %s187 = scalar_select %p184, %s185, %s186
      %p190 = pneg %p184
      %p191 = scmp.eq.s32.totalorder %s15, 1
      %p192 = por %p190, %p191
      %p193 = scmp.ne.s32.totalorder %s185, %s188
      %p194 = scmp.eq.s32.totalorder %s15, 0
      %p195 = por %p193, %p194
      %p196 = scmp.ne.s32.totalorder %s185, %s188
      %p197 = scmp.eq.s32.totalorder %s20, 1
      %p198 = por %p196, %p197
      %p199 = scmp.ne.s32.totalorder %s188, %s189
      %p200 = scmp.eq.s32.totalorder %s20, 0
      %p201 = por %p199, %p200
      %p202 = scmp.ne.s32.totalorder %s188, %s189
      %p203 = scmp.eq.s32.totalorder %s21, 1
      %p204 = por %p202, %p203
      %p206 = scmp.ne.s32.totalorder %s189, %s205
      %p207 = scmp.eq.s32.totalorder %s21, 0
      %p208 = por %p206, %p207
      %p209 = scmp.le.s32.totalorder 1, %s15
      %p210 = scmp.lt.s32.totalorder %s15, 3
      %p211 = pnand %p209, %p210
      %p212 = pneg %p211
      // Predicated region
      $region9: #{tpu_custom_call.1} parent=5 // pred_check
        _
      $region10: #{tpu_custom_call.1} parent=5 // pred_check_branch
        %214 = sbr.rel (%p211) target = $region12
      $region11: #{tpu_custom_call.1} parent=5 // pred_region
        %s215 = ssub.s32 %s15, 1
        // Predicated region
        $region13: #{tpu_custom_call.1} parent=11 // pred_check
          %p216 = pneg %p79
        $region14: #{tpu_custom_call.1} parent=11 // pred_check_branch
          %218 = sbr.rel (%p216) target = $region16
        $region15: #{tpu_custom_call.1} parent=11 // pred_region
          %p219 = scmp.lt.s32.totalorder %s25, 0
          %s220 = scalar_select %p219, %s25, 0
          %s221 = smul.addr %s220, 4
          %s222 = scalar_lea.vmem %s1, %s221
        $region16: #{tpu_custom_call.1} parent=11 // pred_fallthru
          _
        // Predicated region
        $region17: #{tpu_custom_call.1} parent=11 // pred_check
          %p223 = pneg %p100
        $region18: #{tpu_custom_call.1} parent=11 // pred_check_branch
          %225 = sbr.rel (%p223) target = $region20
        $region19: #{tpu_custom_call.1} parent=11 // pred_region
          _
        $region20: #{tpu_custom_call.1} parent=11 // pred_fallthru
          _
        // Predicated region
        $region21: #{tpu_custom_call.1} parent=11 // pred_check
          %p226 = pneg %p121
        $region22: #{tpu_custom_call.1} parent=11 // pred_check_branch
          %228 = sbr.rel (%p226) target = $region24
        $region23: #{tpu_custom_call.1} parent=11 // pred_region
          _
        $region24: #{tpu_custom_call.1} parent=11 // pred_fallthru
          _
        // Predicated region
        $region25: #{tpu_custom_call.1} parent=11 // pred_check
          %p229 = pneg %p147
        $region26: #{tpu_custom_call.1} parent=11 // pred_check_branch
          %231 = sbr.rel (%p229) target = $region28
        $region27: #{tpu_custom_call.1} parent=11 // pred_region
          %p232 = scmp.lt.s32.totalorder %s25, 0
          %s233 = scalar_select %p232, %s25, 0
          %s234 = scalar_lea.vmem %s4, %s233
        $region28: #{tpu_custom_call.1} parent=11 // pred_fallthru
          _
        // Predicated region
        $region29: #{tpu_custom_call.1} parent=11 // pred_check
          %p235 = pneg %p173
        $region30: #{tpu_custom_call.1} parent=11 // pred_check_branch
          %237 = sbr.rel (%p235) target = $region32
        $region31: #{tpu_custom_call.1} parent=11 // pred_region
          %p238 = scmp.lt.s32.totalorder %s25, 0
          %s239 = scalar_select %p238, %s25, 0
          %s240 = scalar_lea.vmem %s5, %s239
        $region32: #{tpu_custom_call.1} parent=11 // pred_fallthru
          _
      $region12: #{tpu_custom_call.1} parent=5 // pred_fallthru
        _
      %p241 = scmp.lt.s32.totalorder %s15, 2
      // Predicated region
      $region33: #{tpu_custom_call.1} parent=5 // pred_check
        %p242 = pneg %p241
      $region34: #{tpu_custom_call.1} parent=5 // pred_check_branch
        %244 = sbr.rel (%p242) target = $region36
      $region35: #{tpu_custom_call.1} parent=5 // pred_region
        // Predicated region
        $region37: #{tpu_custom_call.1} parent=35 // pred_check
          %p245 = pneg %p47
        $region38: #{tpu_custom_call.1} parent=35 // pred_check_branch
          %247 = sbr.rel (%p245) target = $region40
        $region39: #{tpu_custom_call.1} parent=35 // pred_region
          %s248 = smul.u32 32, %s22
          %p249 = scmp.lt.s32.totalorder %s248, 63
          %s250 = scalar_select %p249, %s248, 63
          %s251 = smul.addr %s250, 2
          %s252 = smul.addr %s251, 4
          %s253 = scalar_lea.vmem %s0, %s252
          %s254 = smul.u32 32, %s22
        $region40: #{tpu_custom_call.1} parent=35 // pred_fallthru
          _
      $region36: #{tpu_custom_call.1} parent=5 // pred_fallthru
        _
      %p255 = scmp.le.s32.totalorder 1, %s15
      %p256 = scmp.lt.s32.totalorder %s15, 3
      %p257 = pnand %p255, %p256
      %p258 = pneg %p257
      // Predicated region
      $region41: #{tpu_custom_call.1} parent=5 // pred_check
        _
      $region42: #{tpu_custom_call.1} parent=5 // pred_check_branch
        %260 = sbr.rel (%p257) target = $region44
      $region43: #{tpu_custom_call.1} parent=5 // pred_region
        %s261 = ssub.s32 %s15, 1
        %s262 = smul.u32 32, %s24
        %p263 = scmp.lt.s32.totalorder %s262, 63
        %s264 = scalar_select %p263, %s262, 63
        %s265 = smul.addr %s264, 2
        %s266 = smul.addr %s265, 4
        %s267 = scalar_lea.vmem %s0, %s266
        %p268 = pneg %p53
        %p269 = pneg %p50
        %p270 = scmp.lt.s32.totalorder %s25, 0
        %s271 = scalar_select %p270, %s25, 0
        %s272 = smul.addr %s271, 4
        %s273 = scalar_lea.vmem %s1, %s272
        %p274 = pneg %p79
        %p275 = pneg %p76
        %p276 = pneg %p100
        %p277 = pneg %p97
        %p278 = pneg %p121
        %p279 = pneg %p118
        %p280 = scmp.lt.s32.totalorder %s25, 0
        %s281 = scalar_select %p280, %s25, 0
        %s282 = scalar_lea.vmem %s4, %s281
        %p283 = pneg %p147
        %p284 = pneg %p144
        %p285 = scmp.lt.s32.totalorder %s25, 0
        %s286 = scalar_select %p285, %s25, 0
        %s287 = scalar_lea.vmem %s5, %s286
        %p288 = pneg %p173
        %p289 = pneg %p170
        %p290 = pneg %p201
        %p291 = pneg %p198
        %s292 = sand.u32 %s188, 1
        %s293 = scalar_lea.sflag [#allocation3], %s292
        %s294 = sand.u32 %s188, 1
        %s295 = smul.addr %s294, 128
        %s296 = scalar_lea.vmem [#allocation2], %s295
        %s297 = smul.u32 32, %s24
        %p298 = scmp.lt.s32.totalorder %s297, 63
        %s299 = scalar_select %p298, %s297, 63
        %s300 = smul.addr %s299, 2
        %s301 = smul.addr %s300, 4
        %s302 = scalar_lea.vmem %s0, %s301
        %s303 = smul.u32 32, %s24
        %p304 = scmp.lt.s32.totalorder %s25, 0
        %s305 = scalar_select %p304, %s25, 0
        %s306 = smul.addr %s305, 4
        %s307 = scalar_lea.vmem %s1, %s306
        %p308 = scmp.lt.s32.totalorder %s25, 0
        %s309 = scalar_select %p308, %s25, 0
        %s310 = scalar_lea.vmem %s4, %s309
        %p311 = scmp.lt.s32.totalorder %s25, 0
        %s312 = scalar_select %p311, %s25, 0
        %s313 = scalar_lea.vmem %s5, %s312
        %s314 = smul.u32 32, %s24
        %v316 = vld [vmem:[%s302] sm:$0xff]
        %v317 = vld [vmem:[%s302 + $0x8] sm:$0xff]
        %v318 = vld [vmem:[%s302 + $0x10] sm:$0xff]
        %v319 = vld [vmem:[%s302 + $0x18] sm:$0xff]
        %v320 = vld [vmem:[%s302 + $0x20] sm:$0xff]
        %v321 = vld [vmem:[%s302 + $0x28] sm:$0xff]
        %v322 = vld [vmem:[%s302 + $0x30] sm:$0xff]
        %v323 = vld [vmem:[%s302 + $0x38] sm:$0xff]
        %v324 = vld [vmem:[%s302 + $0x40] sm:$0xff]
        %v325 = vld [vmem:[%s302 + $0x48] sm:$0xff]
        %v326 = vld [vmem:[%s302 + $0x50] sm:$0xff]
        %v327 = vld [vmem:[%s302 + $0x58] sm:$0xff]
        %v328 = vld [vmem:[%s302 + $0x60] sm:$0xff]
        %v329 = vld [vmem:[%s302 + $0x68] sm:$0xff]
        %v330 = vld [vmem:[%s302 + $0x70] sm:$0xff]
        %v331 = vld [vmem:[%s302 + $0x78] sm:$0xff]
        %v332 = vld [vmem:[%s302 + $0x80] sm:$0xff]
        %v333 = vld [vmem:[%s302 + $0x88] sm:$0xff]
        %v334 = vld [vmem:[%s302 + $0x90] sm:$0xff]
        %v335 = vld [vmem:[%s302 + $0x98] sm:$0xff]
        %v336 = vld [vmem:[%s302 + $0xa0] sm:$0xff]
        %v337 = vld [vmem:[%s302 + $0xa8] sm:$0xff]
        %v338 = vld [vmem:[%s302 + $0xb0] sm:$0xff]
        %v339 = vld [vmem:[%s302 + $0xb8] sm:$0xff]
        %v340 = vld [vmem:[%s302 + $0xc0] sm:$0xff]
        %v341 = vld [vmem:[%s302 + $0xc8] sm:$0xff]
        %v342 = vld [vmem:[%s302 + $0xd0] sm:$0xff]
        %v343 = vld [vmem:[%s302 + $0xd8] sm:$0xff]
        %v344 = vld [vmem:[%s302 + $0xe0] sm:$0xff]
        %v345 = vld [vmem:[%s302 + $0xe8] sm:$0xff]
        %v346 = vld [vmem:[%s302 + $0xf0] sm:$0xff]
        %v347 = vld [vmem:[%s302 + $0xf8] sm:$0xff]
        %v348 = vld [vmem:[%s307] sm:$0xf]
        %v349 = vld [vmem:[%s307 + $0x4] sm:$0xf]
        %v350 = vld [vmem:[%s307 + $0x8] sm:$0xf]
        %v351 = vld [vmem:[%s307 + $0xc] sm:$0xf]
        %v352 = vld [vmem:[%s307 + $0x10] sm:$0xf]
        %v353 = vld [vmem:[%s307 + $0x14] sm:$0xf]
        %v354 = vld [vmem:[%s307 + $0x18] sm:$0xf]
        %v355 = vld [vmem:[%s307 + $0x1c] sm:$0xf]
        %v356 = vld [vmem:[%s307 + $0x20] sm:$0xf]
        %v357 = vld [vmem:[%s307 + $0x24] sm:$0xf]
        %v358 = vld [vmem:[%s307 + $0x28] sm:$0xf]
        %v359 = vld [vmem:[%s307 + $0x2c] sm:$0xf]
        %v360 = vld [vmem:[%s307 + $0x30] sm:$0xf]
        %v361 = vld [vmem:[%s307 + $0x34] sm:$0xf]
        %v362 = vld [vmem:[%s307 + $0x38] sm:$0xf]
        %v363 = vld [vmem:[%s307 + $0x3c] sm:$0xf]
        %v364 = vld [vmem:[%s307 + $0x40] sm:$0xf]
        %v365 = vld [vmem:[%s307 + $0x44] sm:$0xf]
        %v366 = vld [vmem:[%s307 + $0x48] sm:$0xf]
        %v399 = vunpack.c.l.b16 %v316
        %v400 = vunpack.c.h.b16 %v316
        %v401 = vunpack.c.l.b16 %v317
        %v402 = vunpack.c.h.b16 %v317
        %v403 = vunpack.c.l.b16 %v318
        %v404 = vunpack.c.h.b16 %v318
        %v405 = vunpack.c.l.b16 %v319
        %v406 = vunpack.c.h.b16 %v319
        %v407 = vunpack.c.l.b16 %v320
        %v408 = vunpack.c.h.b16 %v320
        %v409 = vunpack.c.l.b16 %v321
        %v410 = vunpack.c.h.b16 %v321
        %v411 = vunpack.c.l.b16 %v322
        %v412 = vunpack.c.h.b16 %v322
        %v413 = vunpack.c.l.b16 %v323
        %v414 = vunpack.c.h.b16 %v323
        %v415 = vunpack.c.l.b16 %v324
        %v416 = vunpack.c.h.b16 %v324
        %v417 = vunpack.c.l.b16 %v325
        %v418 = vunpack.c.h.b16 %v325
        %v419 = vunpack.c.l.b16 %v326
        %v420 = vunpack.c.h.b16 %v326
        %v421 = vunpack.c.l.b16 %v327
        %v422 = vunpack.c.h.b16 %v327
        %v423 = vunpack.c.l.b16 %v328
        %v424 = vunpack.c.h.b16 %v328
        %v425 = vunpack.c.l.b16 %v329
        %v426 = vunpack.c.h.b16 %v329
        %v427 = vunpack.c.l.b16 %v330
        %v428 = vunpack.c.h.b16 %v330
        %v429 = vunpack.c.l.b16 %v331
        %v430 = vunpack.c.h.b16 %v331
        %v431 = vunpack.c.l.b16 %v332
        %v432 = vunpack.c.h.b16 %v332
        %v433 = vunpack.c.l.b16 %v333
        %v434 = vunpack.c.h.b16 %v333
        %v435 = vunpack.c.l.b16 %v334
        %v436 = vunpack.c.h.b16 %v334
        %v437 = vunpack.c.l.b16 %v335
        %v438 = vunpack.c.h.b16 %v335
        %v439 = vunpack.c.l.b16 %v336
        %v440 = vunpack.c.h.b16 %v336
        %v441 = vunpack.c.l.b16 %v337
        %v442 = vunpack.c.h.b16 %v337
        %v443 = vunpack.c.l.b16 %v338
        %v444 = vunpack.c.h.b16 %v338
        %v445 = vunpack.c.l.b16 %v339
        %v446 = vunpack.c.h.b16 %v339
        %v447 = vunpack.c.l.b16 %v340
        %v448 = vunpack.c.h.b16 %v340
        %v449 = vunpack.c.l.b16 %v341
        %v450 = vunpack.c.h.b16 %v341
        %v451 = vunpack.c.l.b16 %v342
        %v452 = vunpack.c.h.b16 %v342
        %v453 = vunpack.c.l.b16 %v343
        %v454 = vunpack.c.h.b16 %v343
        %v455 = vunpack.c.l.b16 %v344
        %v456 = vunpack.c.h.b16 %v344
        %v457 = vunpack.c.l.b16 %v345
        %v458 = vunpack.c.h.b16 %v345
        %v459 = vunpack.c.l.b16 %v346
        %v460 = vunpack.c.h.b16 %v346
        %v461 = vunpack.c.l.b16 %v347
        %v462 = vunpack.c.h.b16 %v347
        %v463 = vpack.c.b16 %v401, %v399
        %v464 = vpack.c.b16 %v402, %v400
        %v465 = vpack.c.b16 %v405, %v403
        %v466 = vpack.c.b16 %v406, %v404
        %v467 = vpack.c.b16 %v409, %v407
        %v468 = vpack.c.b16 %v410, %v408
        %v469 = vpack.c.b16 %v413, %v411
        %v470 = vpack.c.b16 %v414, %v412
        %v471 = vpack.c.b16 %v417, %v415
        %v472 = vpack.c.b16 %v418, %v416
        %v473 = vpack.c.b16 %v421, %v419
        %v474 = vpack.c.b16 %v422, %v420
        %v475 = vpack.c.b16 %v425, %v423
        %v476 = vpack.c.b16 %v426, %v424
        %v477 = vpack.c.b16 %v429, %v427
        %v478 = vpack.c.b16 %v430, %v428
        %v479 = vpack.c.b16 %v433, %v431
        %v480 = vpack.c.b16 %v434, %v432
        %v481 = vpack.c.b16 %v437, %v435
        %v482 = vpack.c.b16 %v438, %v436
        %v483 = vpack.c.b16 %v441, %v439
        %v484 = vpack.c.b16 %v442, %v440
        %v485 = vpack.c.b16 %v445, %v443
        %v486 = vpack.c.b16 %v446, %v444
        %v487 = vpack.c.b16 %v449, %v447
        %v488 = vpack.c.b16 %v450, %v448
        %v489 = vpack.c.b16 %v453, %v451
        %v490 = vpack.c.b16 %v454, %v452
        %v491 = vpack.c.b16 %v457, %v455
        %v492 = vpack.c.b16 %v458, %v456
        %v493 = vpack.c.b16 %v461, %v459
        %v494 = vpack.c.b16 %v462, %v460
        %v530 = vunpack.c.l.b16 %v348
        %v531 = vunpack.c.l.b16 %v349
        %v532 = vunpack.c.l.b16 %v350
        %v533 = vunpack.c.l.b16 %v351
        %v534 = vunpack.c.l.b16 %v352
        %v535 = vunpack.c.l.b16 %v353
        %v536 = vunpack.c.l.b16 %v354
        %v537 = vunpack.c.l.b16 %v355
        %v538 = vunpack.c.l.b16 %v356
        %v539 = vunpack.c.l.b16 %v357
        %v540 = vunpack.c.l.b16 %v358
        %v541 = vunpack.c.l.b16 %v359
        %v542 = vunpack.c.l.b16 %v360
        %v543 = vunpack.c.l.b16 %v361
        %v544 = vunpack.c.l.b16 %v362
        %v545 = vunpack.c.l.b16 %v363
        %v546 = vunpack.c.l.b16 %v364
        %v547 = vunpack.c.l.b16 %v365
        %v548 = vunpack.c.l.b16 %v366
        %v549 = vpack.c.b16 %v531, %v530
        %v550 = vpack.c.b16 %v533, %v532
        %v551 = vpack.c.b16 %v535, %v534
        %v552 = vpack.c.b16 %v537, %v536
        %v553 = vpack.c.b16 %v539, %v538
        %v554 = vpack.c.b16 %v541, %v540
        %v555 = vpack.c.b16 %v543, %v542
        %v556 = vpack.c.b16 %v545, %v544
        %v557 = vpack.c.b16 %v547, %v546
        %v558 = vpack.c.b16 %v548, %v548
        %vm568 = vcmask 195584
        %v570 = vsel %vm568, %v464, 0
        %v573 = vsel %vm568, %v466, 0
        %v576 = vsel %vm568, %v468, 0
        %v579 = vsel %vm568, %v470, 0
        %v582 = vsel %vm568, %v472, 0
        %v585 = vsel %vm568, %v474, 0
        %v588 = vsel %vm568, %v476, 0
        %v591 = vsel %vm568, %v478, 0
        %v594 = vsel %vm568, %v480, 0
        %v597 = vsel %vm568, %v482, 0
        %v600 = vsel %vm568, %v484, 0
        %v603 = vsel %vm568, %v486, 0
        %v606 = vsel %vm568, %v488, 0
        %v609 = vsel %vm568, %v490, 0
        %v612 = vsel %vm568, %v492, 0
        %v615 = vsel %vm568, %v494, 0
        %vm617 = vcmask 1043456
        %v619 = vsel %vm617, %v558, 0
        %621 = vmatpush.bf16.msra.mxu0 %v556
        %622 = vmatpush.bf16.msra.mxu0 %v555
        %623 = vmatpush.bf16.msra.mxu0 %v554
        %624 = vmatpush.bf16.msra.mxu0 %v553
        %625 = vmatpush.bf16.msra.mxu0 %v552
        %626 = vmatpush.bf16.msra.mxu0 %v551
        %627 = vmatpush.bf16.msra.mxu0 %v550
        %628 = vmatpush.bf16.msra.mxu0 %v549
        %629 = vmatmul.bf16.gmra.mxu0 %v463
        %v630 = vpop.f32.mrf.mxu0
        %v631 = vadd.f32 0.0, %v630
        %v632 = vpop.f32.mrf.mxu0
        %v633 = vadd.f32 0.0, %v632
        %634 = vmatmul.bf16.gmra.mxu0 %v465
        %v635 = vpop.f32.mrf.mxu0
        %v636 = vadd.f32 0.0, %v635
        %v637 = vpop.f32.mrf.mxu0
        %v638 = vadd.f32 0.0, %v637
        %639 = vmatmul.bf16.gmra.mxu0 %v467
        %v640 = vpop.f32.mrf.mxu0
        %v641 = vadd.f32 0.0, %v640
        %v642 = vpop.f32.mrf.mxu0
        %v643 = vadd.f32 0.0, %v642
        %644 = vmatmul.bf16.gmra.mxu0 %v469
        %v645 = vpop.f32.mrf.mxu0
        %v646 = vadd.f32 0.0, %v645
        %v647 = vpop.f32.mrf.mxu0
        %v648 = vadd.f32 0.0, %v647
        %649 = vmatmul.bf16.gmra.mxu0 %v471
        %v650 = vpop.f32.mrf.mxu0
        %v651 = vadd.f32 0.0, %v650
        %v652 = vpop.f32.mrf.mxu0
        %v653 = vadd.f32 0.0, %v652
        %654 = vmatmul.bf16.gmra.mxu0 %v473
        %v655 = vpop.f32.mrf.mxu0
        %v656 = vadd.f32 0.0, %v655
        %v657 = vpop.f32.mrf.mxu0
        %v658 = vadd.f32 0.0, %v657
        %659 = vmatmul.bf16.gmra.mxu0 %v475
        %v660 = vpop.f32.mrf.mxu0
        %v661 = vadd.f32 0.0, %v660
        %v662 = vpop.f32.mrf.mxu0
        %v663 = vadd.f32 0.0, %v662
        %664 = vmatmul.bf16.gmra.mxu0 %v477
        %v665 = vpop.f32.mrf.mxu0
        %v666 = vadd.f32 0.0, %v665
        %v667 = vpop.f32.mrf.mxu0
        %v668 = vadd.f32 0.0, %v667
        %669 = vmatmul.bf16.gmra.mxu0 %v479
        %v670 = vpop.f32.mrf.mxu0
        %v671 = vadd.f32 0.0, %v670
        %v672 = vpop.f32.mrf.mxu0
        %v673 = vadd.f32 0.0, %v672
        %674 = vmatmul.bf16.gmra.mxu0 %v481
        %v675 = vpop.f32.mrf.mxu0
        %v676 = vadd.f32 0.0, %v675
        %v677 = vpop.f32.mrf.mxu0
        %v678 = vadd.f32 0.0, %v677
        %679 = vmatmul.bf16.gmra.mxu0 %v483
        %v680 = vpop.f32.mrf.mxu0
        %v681 = vadd.f32 0.0, %v680
        %v682 = vpop.f32.mrf.mxu0
        %v683 = vadd.f32 0.0, %v682
        %684 = vmatmul.bf16.gmra.mxu0 %v485
        %v685 = vpop.f32.mrf.mxu0
        %v686 = vadd.f32 0.0, %v685
        %v687 = vpop.f32.mrf.mxu0
        %v688 = vadd.f32 0.0, %v687
        %689 = vmatmul.bf16.gmra.mxu0 %v487
        %v690 = vpop.f32.mrf.mxu0
        %v691 = vadd.f32 0.0, %v690
        %v692 = vpop.f32.mrf.mxu0
        %v693 = vadd.f32 0.0, %v692
        %694 = vmatmul.bf16.gmra.mxu0 %v489
        %v695 = vpop.f32.mrf.mxu0
        %v696 = vadd.f32 0.0, %v695
        %v697 = vpop.f32.mrf.mxu0
        %v698 = vadd.f32 0.0, %v697
        %699 = vmatmul.bf16.gmra.mxu0 %v491
        %v700 = vpop.f32.mrf.mxu0
        %v701 = vadd.f32 0.0, %v700
        %v702 = vpop.f32.mrf.mxu0
        %v703 = vadd.f32 0.0, %v702
        %704 = vmatmul.bf16.gmra.mxu0 %v493
        %v705 = vpop.f32.mrf.mxu0
        %v706 = vadd.f32 0.0, %v705
        %v707 = vpop.f32.mrf.mxu0
        %v708 = vadd.f32 0.0, %v707
        %709 = vdwg.mxu0
        %710 = vmatpush.bf16.msra.mxu0 0
        %711 = vmatpush.bf16.msra.mxu0 0
        %712 = vmatpush.bf16.msra.mxu0 0
        %713 = vmatpush.bf16.msra.mxu0 0
        %714 = vmatpush.bf16.msra.mxu0 0
        %715 = vmatpush.bf16.msra.mxu0 0
        %716 = vmatpush.bf16.msra.mxu0 %v619
        %717 = vmatpush.bf16.msra.mxu0 %v557
        %718 = vmatmul.bf16.gmra.mxu0 %v570
        %v719 = vpop.f32.mrf.mxu0
        %v720 = vadd.f32 %v631, %v719
        %v721 = vpop.f32.mrf.mxu0
        %v722 = vadd.f32 %v633, %v721
        %723 = vmatmul.bf16.gmra.mxu0 %v573
        %v724 = vpop.f32.mrf.mxu0
        %v725 = vadd.f32 %v636, %v724
        %v726 = vpop.f32.mrf.mxu0
        %v727 = vadd.f32 %v638, %v726
        %728 = vmatmul.bf16.gmra.mxu0 %v576
        %v729 = vpop.f32.mrf.mxu0
        %v730 = vadd.f32 %v641, %v729
        %v731 = vpop.f32.mrf.mxu0
        %v732 = vadd.f32 %v643, %v731
        %733 = vmatmul.bf16.gmra.mxu0 %v579
        %v734 = vpop.f32.mrf.mxu0
        %v735 = vadd.f32 %v646, %v734
        %v736 = vpop.f32.mrf.mxu0
        %v737 = vadd.f32 %v648, %v736
        %738 = vmatmul.bf16.gmra.mxu0 %v582
        %v739 = vpop.f32.mrf.mxu0
        %v740 = vadd.f32 %v651, %v739
        %v741 = vpop.f32.mrf.mxu0
        %v742 = vadd.f32 %v653, %v741
        %743 = vmatmul.bf16.gmra.mxu0 %v585
        %v744 = vpop.f32.mrf.mxu0
        %v745 = vadd.f32 %v656, %v744
        %v746 = vpop.f32.mrf.mxu0
        %v747 = vadd.f32 %v658, %v746
        %748 = vmatmul.bf16.gmra.mxu0 %v588
        %v749 = vpop.f32.mrf.mxu0
        %v750 = vadd.f32 %v661, %v749
        %v751 = vpop.f32.mrf.mxu0
        %v752 = vadd.f32 %v663, %v751
        %753 = vmatmul.bf16.gmra.mxu0 %v591
        %v754 = vpop.f32.mrf.mxu0
        %v755 = vadd.f32 %v666, %v754
        %v756 = vpop.f32.mrf.mxu0
        %v757 = vadd.f32 %v668, %v756
        %758 = vmatmul.bf16.gmra.mxu0 %v594
        %v759 = vpop.f32.mrf.mxu0
        %v760 = vadd.f32 %v671, %v759
        %v761 = vpop.f32.mrf.mxu0
        %v762 = vadd.f32 %v673, %v761
        %763 = vmatmul.bf16.gmra.mxu0 %v597
        %v764 = vpop.f32.mrf.mxu0
        %v765 = vadd.f32 %v676, %v764
        %v766 = vpop.f32.mrf.mxu0
        %v767 = vadd.f32 %v678, %v766
        %768 = vmatmul.bf16.gmra.mxu0 %v600
        %v769 = vpop.f32.mrf.mxu0
        %v770 = vadd.f32 %v681, %v769
        %v771 = vpop.f32.mrf.mxu0
        %v772 = vadd.f32 %v683, %v771
        %773 = vmatmul.bf16.gmra.mxu0 %v603
        %v774 = vpop.f32.mrf.mxu0
        %v775 = vadd.f32 %v686, %v774
        %v776 = vpop.f32.mrf.mxu0
        %v777 = vadd.f32 %v688, %v776
        %778 = vmatmul.bf16.gmra.mxu0 %v606
        %v779 = vpop.f32.mrf.mxu0
        %v780 = vadd.f32 %v691, %v779
        %v781 = vpop.f32.mrf.mxu0
        %v782 = vadd.f32 %v693, %v781
        %783 = vmatmul.bf16.gmra.mxu0 %v609
        %v784 = vpop.f32.mrf.mxu0
        %v785 = vadd.f32 %v696, %v784
        %v786 = vpop.f32.mrf.mxu0
        %v787 = vadd.f32 %v698, %v786
        %788 = vmatmul.bf16.gmra.mxu0 %v612
        %v789 = vpop.f32.mrf.mxu0
        %v790 = vadd.f32 %v701, %v789
        %v791 = vpop.f32.mrf.mxu0
        %v792 = vadd.f32 %v703, %v791
        %793 = vmatmul.bf16.gmra.mxu0 %v615
        %v794 = vpop.f32.mrf.mxu0
        %v795 = vadd.f32 %v706, %v794
        %v796 = vpop.f32.mrf.mxu0
        %v797 = vadd.f32 %v708, %v796
        %798 = vdwg.mxu0
        %v799 = vld [vmem:[%s310] sm:$0x1]
        %v801 = vperm.slane %v799, 0
        %v803 = vmul.f32 %v720, %v801
        %v804 = vmul.f32 %v722, %v801
        %v805 = vmul.f32 %v725, %v801
        %v806 = vmul.f32 %v727, %v801
        %v807 = vmul.f32 %v730, %v801
        %v808 = vmul.f32 %v732, %v801
        %v809 = vmul.f32 %v735, %v801
        %v810 = vmul.f32 %v737, %v801
        %v811 = vmul.f32 %v740, %v801
        %v812 = vmul.f32 %v742, %v801
        %v813 = vmul.f32 %v745, %v801
        %v814 = vmul.f32 %v747, %v801
        %v815 = vmul.f32 %v750, %v801
        %v816 = vmul.f32 %v752, %v801
        %v817 = vmul.f32 %v755, %v801
        %v818 = vmul.f32 %v757, %v801
        %v819 = vmul.f32 %v760, %v801
        %v820 = vmul.f32 %v762, %v801
        %v821 = vmul.f32 %v765, %v801
        %v822 = vmul.f32 %v767, %v801
        %v823 = vmul.f32 %v770, %v801
        %v824 = vmul.f32 %v772, %v801
        %v825 = vmul.f32 %v775, %v801
        %v826 = vmul.f32 %v777, %v801
        %v827 = vmul.f32 %v780, %v801
        %v828 = vmul.f32 %v782, %v801
        %v829 = vmul.f32 %v785, %v801
        %v830 = vmul.f32 %v787, %v801
        %v831 = vmul.f32 %v790, %v801
        %v832 = vmul.f32 %v792, %v801
        %v833 = vmul.f32 %v795, %v801
        %v834 = vmul.f32 %v797, %v801
        %v835 = vld [vmem:[%s313] sm:$0x1]
        %v837 = vperm.slane %v835, 0
        %v839 = vadd.f32 %v803, %v837
        %v840 = vadd.f32 %v804, %v837
        %v841 = vadd.f32 %v805, %v837
        %v842 = vadd.f32 %v806, %v837
        %v843 = vadd.f32 %v807, %v837
        %v844 = vadd.f32 %v808, %v837
        %v845 = vadd.f32 %v809, %v837
        %v846 = vadd.f32 %v810, %v837
        %v847 = vadd.f32 %v811, %v837
        %v848 = vadd.f32 %v812, %v837
        %v849 = vadd.f32 %v813, %v837
        %v850 = vadd.f32 %v814, %v837
        %v851 = vadd.f32 %v815, %v837
        %v852 = vadd.f32 %v816, %v837
        %v853 = vadd.f32 %v817, %v837
        %v854 = vadd.f32 %v818, %v837
        %v855 = vadd.f32 %v819, %v837
        %v856 = vadd.f32 %v820, %v837
        %v857 = vadd.f32 %v821, %v837
        %v858 = vadd.f32 %v822, %v837
        %v859 = vadd.f32 %v823, %v837
        %v860 = vadd.f32 %v824, %v837
        %v861 = vadd.f32 %v825, %v837
        %v862 = vadd.f32 %v826, %v837
        %v863 = vadd.f32 %v827, %v837
        %v864 = vadd.f32 %v828, %v837
        %v865 = vadd.f32 %v829, %v837
        %v866 = vadd.f32 %v830, %v837
        %v867 = vadd.f32 %v831, %v837
        %v868 = vadd.f32 %v832, %v837
        %v869 = vadd.f32 %v833, %v837
        %v870 = vadd.f32 %v834, %v837
        %v871 = vmax.f32 %v839, 0.0
        %v872 = vmax.f32 %v840, 0.0
        %v873 = vmax.f32 %v841, 0.0
        %v874 = vmax.f32 %v842, 0.0
        %v875 = vmax.f32 %v843, 0.0
        %v876 = vmax.f32 %v844, 0.0
        %v877 = vmax.f32 %v845, 0.0
        %v878 = vmax.f32 %v846, 0.0
        %v879 = vmax.f32 %v847, 0.0
        %v880 = vmax.f32 %v848, 0.0
        %v881 = vmax.f32 %v849, 0.0
        %v882 = vmax.f32 %v850, 0.0
        %v883 = vmax.f32 %v851, 0.0
        %v884 = vmax.f32 %v852, 0.0
        %v885 = vmax.f32 %v853, 0.0
        %v886 = vmax.f32 %v854, 0.0
        %v887 = vmax.f32 %v855, 0.0
        %v888 = vmax.f32 %v856, 0.0
        %v889 = vmax.f32 %v857, 0.0
        %v890 = vmax.f32 %v858, 0.0
        %v891 = vmax.f32 %v859, 0.0
        %v892 = vmax.f32 %v860, 0.0
        %v893 = vmax.f32 %v861, 0.0
        %v894 = vmax.f32 %v862, 0.0
        %v895 = vmax.f32 %v863, 0.0
        %v896 = vmax.f32 %v864, 0.0
        %v897 = vmax.f32 %v865, 0.0
        %v898 = vmax.f32 %v866, 0.0
        %v899 = vmax.f32 %v867, 0.0
        %v900 = vmax.f32 %v868, 0.0
        %v901 = vmax.f32 %v869, 0.0
        %v902 = vmax.f32 %v870, 0.0
        %v903 = vpack.c.bf16 %v871, %v871
        %v904 = vpack.c.bf16 %v872, %v872
        %v905 = vpack.c.bf16 %v873, %v873
        %v906 = vpack.c.bf16 %v874, %v874
        %v907 = vpack.c.bf16 %v875, %v875
        %v908 = vpack.c.bf16 %v876, %v876
        %v909 = vpack.c.bf16 %v877, %v877
        %v910 = vpack.c.bf16 %v878, %v878
        %v911 = vpack.c.bf16 %v879, %v879
        %v912 = vpack.c.bf16 %v880, %v880
        %v913 = vpack.c.bf16 %v881, %v881
        %v914 = vpack.c.bf16 %v882, %v882
        %v915 = vpack.c.bf16 %v883, %v883
        %v916 = vpack.c.bf16 %v884, %v884
        %v917 = vpack.c.bf16 %v885, %v885
        %v918 = vpack.c.bf16 %v886, %v886
        %v919 = vpack.c.bf16 %v887, %v887
        %v920 = vpack.c.bf16 %v888, %v888
        %v921 = vpack.c.bf16 %v889, %v889
        %v922 = vpack.c.bf16 %v890, %v890
        %v923 = vpack.c.bf16 %v891, %v891
        %v924 = vpack.c.bf16 %v892, %v892
        %v925 = vpack.c.bf16 %v893, %v893
        %v926 = vpack.c.bf16 %v894, %v894
        %v927 = vpack.c.bf16 %v895, %v895
        %v928 = vpack.c.bf16 %v896, %v896
        %v929 = vpack.c.bf16 %v897, %v897
        %v930 = vpack.c.bf16 %v898, %v898
        %v931 = vpack.c.bf16 %v899, %v899
        %v932 = vpack.c.bf16 %v900, %v900
        %v933 = vpack.c.bf16 %v901, %v901
        %v934 = vpack.c.bf16 %v902, %v902
        %935 = vst [vmem:[%s296] sm:$0xf] %v903
        %936 = vst [vmem:[%s296 + $0x4] sm:$0xf] %v904
        %937 = vst [vmem:[%s296 + $0x8] sm:$0xf] %v905
        %938 = vst [vmem:[%s296 + $0xc] sm:$0xf] %v906
        %939 = vst [vmem:[%s296 + $0x10] sm:$0xf] %v907
        %940 = vst [vmem:[%s296 + $0x14] sm:$0xf] %v908
        %941 = vst [vmem:[%s296 + $0x18] sm:$0xf] %v909
        %942 = vst [vmem:[%s296 + $0x1c] sm:$0xf] %v910
        %943 = vst [vmem:[%s296 + $0x20] sm:$0xf] %v911
        %944 = vst [vmem:[%s296 + $0x24] sm:$0xf] %v912
        %945 = vst [vmem:[%s296 + $0x28] sm:$0xf] %v913
        %946 = vst [vmem:[%s296 + $0x2c] sm:$0xf] %v914
        %947 = vst [vmem:[%s296 + $0x30] sm:$0xf] %v915
        %948 = vst [vmem:[%s296 + $0x34] sm:$0xf] %v916
        %949 = vst [vmem:[%s296 + $0x38] sm:$0xf] %v917
        %950 = vst [vmem:[%s296 + $0x3c] sm:$0xf] %v918
        %951 = vst [vmem:[%s296 + $0x40] sm:$0xf] %v919
        %952 = vst [vmem:[%s296 + $0x44] sm:$0xf] %v920
        %953 = vst [vmem:[%s296 + $0x48] sm:$0xf] %v921
        %954 = vst [vmem:[%s296 + $0x4c] sm:$0xf] %v922
        %955 = vst [vmem:[%s296 + $0x50] sm:$0xf] %v923
        %956 = vst [vmem:[%s296 + $0x54] sm:$0xf] %v924
        %957 = vst [vmem:[%s296 + $0x58] sm:$0xf] %v925
        %958 = vst [vmem:[%s296 + $0x5c] sm:$0xf] %v926
        %959 = vst [vmem:[%s296 + $0x60] sm:$0xf] %v927
        %960 = vst [vmem:[%s296 + $0x64] sm:$0xf] %v928
        %961 = vst [vmem:[%s296 + $0x68] sm:$0xf] %v929
        %962 = vst [vmem:[%s296 + $0x6c] sm:$0xf] %v930
        %963 = vst [vmem:[%s296 + $0x70] sm:$0xf] %v931
        %964 = vst [vmem:[%s296 + $0x74] sm:$0xf] %v932
        %965 = vst [vmem:[%s296 + $0x78] sm:$0xf] %v933
        %966 = vst [vmem:[%s296 + $0x7c] sm:$0xf] %v934
        %s967 = sand.u32 %s188, 1
        %s968 = scalar_lea.sflag [#allocation3], %s967
        %s969 = sand.u32 %s188, 1
        %s970 = smul.addr %s969, 128
        %s971 = scalar_lea.vmem [#allocation2], %s970
        // Predicated region
        $region45: #{tpu_custom_call.1} parent=43 // pred_check
          %p972 = pneg %p198
        $region46: #{tpu_custom_call.1} parent=43 // pred_check_branch
          %974 = sbr.rel (%p972) target = $region48
        $region47: #{tpu_custom_call.1} parent=43 // pred_region
          %s975 = smul.u32 32, %s24
          %977 = vsyncadd %s968, 0
          %s978 = sadd.s32 %s25, %s975
          %s979 = smul.addr %s978, 4
          %s980 = scalar_lea.hbm %s6, %s979
          %s981 = sshll.u32 %s971, 4
          %s982 = int_to_ptr.vmem [resolvable:$true] %s981
          %s983 = sshll.u32 %s980, 4
          %s984 = int_to_ptr.hbm [resolvable:$true] %s983
          %989 = dma.vmem_to_hbm [thread:$0]  %s982, 2048, %s984, %s968, 64, 64, 4
        $region48: #{tpu_custom_call.1} parent=43 // pred_fallthru
          _
      $region44: #{tpu_custom_call.1} parent=5 // pred_fallthru
        _
      %p990 = scmp.le.s32.totalorder 2, %s15
      // Predicated region
      $region49: #{tpu_custom_call.1} parent=5 // pred_check
        %p991 = pneg %p990
      $region50: #{tpu_custom_call.1} parent=5 // pred_check_branch
        %993 = sbr.rel (%p991) target = $region52
      $region51: #{tpu_custom_call.1} parent=5 // pred_region
        %s994 = ssub.s32 %s15, 2
        // Predicated region
        $region53: #{tpu_custom_call.1} parent=51 // pred_check
          %p995 = pneg %p204
        $region54: #{tpu_custom_call.1} parent=51 // pred_check_branch
          %997 = sbr.rel (%p995) target = $region56
        $region55: #{tpu_custom_call.1} parent=51 // pred_region
          %s998 = sand.u32 %s189, 1
          %s999 = scalar_lea.sflag [#allocation3], %s998
          %s1000 = sand.u32 %s189, 1
          %s1001 = smul.addr %s1000, 128
          %s1002 = scalar_lea.vmem [#allocation2], %s1001
          %1004 = dma.done %s999, 2048
        $region56: #{tpu_custom_call.1} parent=51 // pred_fallthru
          _
      $region52: #{tpu_custom_call.1} parent=5 // pred_fallthru
        _
    $region6: #{tpu_custom_call.1} parent=1 // loop_footer
      %s19 = sadd.s32 1, %s15
    $region7: #{tpu_custom_call.1} parent=1 // loop_footer_branch
      %14 = sbr.rel target = $region3
    $region8: #{tpu_custom_call.1} parent=1 // loop_exit
      _
    %1005 = vsyncpa [#allocation3], 1
    %s1006 = scalar_lea.sflag [#allocation3], 1
    %1007 = vsyncpa %s1006, 1

</llo_original>
